<compile_context>
chip_gen: v6e
topology: v6e:2x2x1
jax: 0.10.0
libtpu: 0.0.40
codegen_flags: <defaults>
</compile_context>

<pallas_src>
import functools
import math

import jax
import jax.numpy as jnp
import numpy as np
from jax.experimental import pallas as pl
from jax.experimental.pallas import tpu as pltpu


# ---------------------------------------------------------------------------
# Tunables / dispatch thresholds.
# ---------------------------------------------------------------------------
_ONEHOT_MAX_VOCAB = 1024           # above this, the HBM row-gather path wins
_ONEHOT_TARGET_ROWS = 256          # MXU M rows per step (256 on v6e/v7x)
_GATHER_TARGET_ROWS = 32           # row DMAs kept in flight per grid step
_MIN_PALLAS_OUT_BYTES = 64 << 10   # below this, plain XLA gather+scale is faster
_CONSERVATIVE_SCOPED_VMEM = 16 << 20   # v5e default scoped-VMEM limit
_VMEM_LIMIT_CAP = 48 << 20         # stay well under v7x's 64 MiB physical VMEM


def _round_up(x, m):
    return (x + m - 1) // m * m


def _pick_rows_per_step(n_rows, target):
    """Rows per grid step: multiple of 8, close to `target`, and >= 2 grid
    steps whenever there is enough work so the v7x megacore can split it."""
    r = min(target, _round_up(n_rows, 8))
    r = max(8, r - r % 8)
    if n_rows > 8 and _round_up(n_rows, r) // r < 2:
        half = r // 2
        r = max(8, half - half % 8)
    return r


# ---------------------------------------------------------------------------
# Kernels.
# ---------------------------------------------------------------------------
def _embed_onehot_kernel(ids_ref, table_ref, o_ref, *, scale):
    """Small-vocab path: one-hot (rows, V) @ (V, D) matmul on the MXU.

    ids_ref   : (R, 1) int32 token ids for this row tile
    table_ref : (V, D) bf16 embedding table (grid-invariant, single-buffered)
    o_ref     : (R, D) output tile
    """
    ids = ids_ref[...]                                        # (R, 1) int32
    rows = ids.shape[0]
    vocab = table_ref.shape[0]

    vocab_iota = jax.lax.broadcasted_iota(jnp.int32, (rows, vocab), 1)
    one_hot = (ids == vocab_iota).astype(table_ref.dtype)     # (R, V) bf16

    # Exactly selects the bf16 rows (single nonzero per row), accumulated f32.
    emb = jnp.dot(one_hot, table_ref[...],
                  preferred_element_type=jnp.float32)          # (R, D) f32
    o_ref[...] = (emb * scale).astype(o_ref.dtype)


def _embed_gather_kernel(ids_ref, table_hbm, o_ref, row_buf, sems, *,
                         scale, rows_per_step):
    """Large-vocab path: per-row DMA gather from the HBM-resident table.

    ids_ref   : (N_pad,) int32 scalar-prefetched token ids (SMEM)
    table_hbm : (V, D) embedding table left in HBM (memory_space=pl.ANY)
    o_ref     : (R, 1, D) output tile
    row_buf   : (R, 1, D) VMEM scratch; each gathered row gets its own (1, D)
                block so every DMA destination is a whole block (no sub-tile
                dynamic sublane offsets for packed bf16 rows)
    sems      : (R,) DMA completion semaphores (one per in-flight row copy)
    """
    base = pl.program_id(0) * rows_per_step

    # Issue every row copy first so all R DMAs overlap, then wait on them all.
    @pl.loop(0, rows_per_step)
    def _issue(j):
        row = ids_ref[base + j]
        pltpu.make_async_copy(table_hbm.at[pl.ds(row, 1)],   # (1, D) HBM slice
                              row_buf.at[j],                 # (1, D) VMEM block
                              sems.at[j]).start()

    @pl.loop(0, rows_per_step)
    def _wait(j):
        pltpu.make_async_copy(table_hbm.at[pl.ds(0, 1)],
                              row_buf.at[j],
                              sems.at[j]).wait()

    o_ref[...] = (row_buf[...].astype(jnp.float32) * scale).astype(o_ref.dtype)


# ---------------------------------------------------------------------------
# pallas_call wrappers for the two paths.
# ---------------------------------------------------------------------------
def _embed_onehot(ids_flat, table, scale):
    vocab, d_embed = table.shape
    n_rows = ids_flat.shape[0]
    itemsize = table.dtype.itemsize

    rows_per_step = _pick_rows_per_step(n_rows, _ONEHOT_TARGET_ROWS)
    n_pad = _round_up(n_rows, rows_per_step)
    ids2d = jnp.pad(ids_flat, (0, n_pad - n_rows)).reshape(n_pad, 1)

    # VMEM estimate: single-buffered table + double-buffered ids/out blocks
    # + (rows, V) iota/one-hot intermediates + f32 matmul result.
    needed = (vocab * d_embed * itemsize
              + 2 * rows_per_step * 4
              + 2 * rows_per_step * d_embed * itemsize
              + rows_per_step * vocab * (4 + itemsize)
              + rows_per_step * d_embed * 4)
    vmem_limit = None
    if needed > _CONSERVATIVE_SCOPED_VMEM:
        vmem_limit = int(min(needed + (4 << 20), _VMEM_LIMIT_CAP))

    def call(single_buffer_table):
        if single_buffer_table:
            # The table's index_map is (0, 0) for every step: double-buffering
            # it buys nothing, so halve its VMEM footprint with Buffered(1).
            table_spec = pl.BlockSpec((vocab, d_embed), lambda i: (0, 0),
                                      pipeline_mode=pl.Buffered(1))
        else:
            table_spec = pl.BlockSpec((vocab, d_embed), lambda i: (0, 0))
        return pl.pallas_call(
            functools.partial(_embed_onehot_kernel, scale=scale),
            out_shape=jax.ShapeDtypeStruct((n_pad, d_embed), table.dtype),
            grid=(n_pad // rows_per_step,),
            in_specs=[
                pl.BlockSpec((rows_per_step, 1), lambda i: (i, 0)),
                table_spec,
            ],
            out_specs=pl.BlockSpec((rows_per_step, d_embed), lambda i: (i, 0)),
            compiler_params=pltpu.CompilerParams(
                dimension_semantics=("parallel",),
                vmem_limit_bytes=vmem_limit),
        )(ids2d, table)

    try:
        out_pad = call(single_buffer_table=True)
    except Exception:
        # TODO(synk): drop this fallback once pl.Buffered(1) single-buffering of
        # grid-invariant inputs is available in every target jax version; the
        # double-buffered table is still correct, it just costs 2x table VMEM.
        out_pad = call(single_buffer_table=False)

    return out_pad[:n_rows]


def _embed_gather(ids_flat, table, scale):
    vocab, d_embed = table.shape
    n_rows = ids_flat.shape[0]

    rows_per_step = _pick_rows_per_step(n_rows, _GATHER_TARGET_ROWS)
    n_pad = _round_up(n_rows, rows_per_step)
    ids_pad = jnp.pad(ids_flat, (0, n_pad - n_rows))     # pad with row 0 (valid)

    grid_spec = pltpu.PrefetchScalarGridSpec(
        num_scalar_prefetch=1,                            # flattened ids -> SMEM
        grid=(n_pad // rows_per_step,),
        in_specs=[pl.BlockSpec(memory_space=pl.ANY)],     # table stays in HBM
        out_specs=pl.BlockSpec((rows_per_step, 1, d_embed),
                               lambda i, ids: (i, 0, 0)),
        scratch_shapes=[
            pltpu.VMEM((rows_per_step, 1, d_embed), table.dtype),
            pltpu.SemaphoreType.DMA((rows_per_step,)),
        ],
    )
    out_pad = pl.pallas_call(
        functools.partial(_embed_gather_kernel, scale=scale,
                          rows_per_step=rows_per_step),
        out_shape=jax.ShapeDtypeStruct((n_pad, 1, d_embed), table.dtype),
        grid_spec=grid_spec,
        compiler_params=pltpu.CompilerParams(
            dimension_semantics=("parallel",)),
    )(ids_pad, table)
    return out_pad[:n_rows, 0, :]


# ---------------------------------------------------------------------------
# Public forward + pure-JAX reference.
# ---------------------------------------------------------------------------
def embedding_int_forward(ids, table, *, method=None, force_pallas=False):
    """ids: integer array (any shape); table: (n_int, d_embed) embedding table.

    Returns table[ids] * sqrt(d_embed), cast back to the table's dtype.
    """
    vocab, d_embed = table.shape
    scale = float(math.sqrt(d_embed))

    lead_shape = ids.shape
    ids_flat = ids.astype(jnp.int32).reshape(-1)
    n_rows = ids_flat.shape[0]

    # Launch-overhead escape hatch: for a few-KiB output the fixed pallas_call
    # cost dominates and the plain XLA gather + scale is faster.
    if (not force_pallas
            and n_rows * d_embed * table.dtype.itemsize < _MIN_PALLAS_OUT_BYTES):
        return embedding_int_reference(ids, table)

    if method is None:
        method = "onehot" if vocab <= _ONEHOT_MAX_VOCAB else "gather"

    if method == "onehot":
        out_flat = _embed_onehot(ids_flat, table, scale)
    elif method == "gather":
        out_flat = _embed_gather(ids_flat, table, scale)
    else:
        raise ValueError(f"unknown method: {method!r}")

    return out_flat.reshape(*lead_shape, d_embed)


def embedding_int_reference(ids, table):
    """Pure-JAX reference matching the PyTorch module (valid indices)."""
    d_embed = table.shape[1]
    emb = jnp.take(table, ids, axis=0)
    return (emb.astype(jnp.float32) * math.sqrt(d_embed)).astype(table.dtype)


def _f32(x):
    return np.asarray(jnp.asarray(x, jnp.float32))


if __name__ == "__main__":
    key = jax.random.PRNGKey(0)
    k_ids1, k_tab1, k_ids2, k_tab2 = jax.random.split(key, 4)

    # Case 1: module-sized small shapes -> one-hot MXU path.
    B, S, n_int, d_embed = 2, 8, 32, 32
    ids = jax.random.randint(k_ids1, (B, S), 0, n_int, dtype=jnp.int32)
    table = jax.random.normal(k_tab1, (n_int, d_embed),
                              jnp.float32).astype(jnp.bfloat16)
    out = jax.block_until_ready(
        embedding_int_forward(ids, table, force_pallas=True))
    np.testing.assert_allclose(
        _f32(out), _f32(embedding_int_reference(ids, table)),
        atol=1e-2, rtol=1e-2)

    # Case 2: larger vocab -> HBM row-gather path (table never enters VMEM).
    B2, S2, n_int2, d_embed2 = 2, 64, 4096, 128
    ids2 = jax.random.randint(k_ids2, (B2, S2), 0, n_int2, dtype=jnp.int32)
    table2 = jax.random.normal(k_tab2, (n_int2, d_embed2),
                               jnp.float32).astype(jnp.bfloat16)
    out2 = jax.block_until_ready(
        embedding_int_forward(ids2, table2, force_pallas=True))
    np.testing.assert_allclose(
        _f32(out2), _f32(embedding_int_reference(ids2, table2)),
        atol=1e-2, rtol=1e-2)

    print("KERNEL_OK")
</pallas_src>

<mosaic_0001>
module attributes {stable_mosaic.version = 11 : i64} {
  func.func @_embed_onehot_kernel(%arg0: i32, %arg1: memref<8x1xi32, #tpu.memory_space<vmem>>, %arg2: memref<32x32xbf16, #tpu.memory_space<vmem>>, %arg3: memref<8x32xbf16, #tpu.memory_space<vmem>>) attributes {dimension_semantics = [#tpu.dimension_semantics<parallel>], iteration_bounds = array<i64: 2>, scalar_prefetch = 0 : i64, scratch_operands = 0 : i64, tpu.core_type = #tpu.core_type<tc>, window_params = [{transform_indices = @transform_0, window_bounds = array<i64: 8, 1>}, {pipeline_mode = #tpu.pipeline_mode<synchronous>, transform_indices = @transform_1, window_bounds = array<i64: 32, 32>}, {transform_indices = @transform_2, window_bounds = array<i64: 8, 32>}]} {
    %c0 = arith.constant 0 : index
    %c0_0 = arith.constant 0 : index
    %0 = vector.load %arg1[%c0, %c0_0] : memref<8x1xi32, #tpu.memory_space<vmem>>, vector<8x1xi32>
    %1 = tpu.iota {dimensions = array<i32: 1>} : vector<8x32xi32>
    %2 = vector.broadcast %0 : vector<8x1xi32> to vector<8x32xi32>
    %3 = arith.cmpi eq, %2, %1 : vector<8x32xi32>
    %4 = arith.extui %3 : vector<8x32xi1> to vector<8x32xi32>
    %5 = arith.sitofp %4 : vector<8x32xi32> to vector<8x32xf32>
    %6 = arith.truncf %5 : vector<8x32xf32> to vector<8x32xbf16>
    %c0_1 = arith.constant 0 : index
    %c0_2 = arith.constant 0 : index
    %7 = vector.load %arg2[%c0_1, %c0_2] : memref<32x32xbf16, #tpu.memory_space<vmem>>, vector<32x32xbf16>
    %cst = arith.constant dense<0.000000e+00> : vector<8x32xf32>
    %8 = tpu.matmul %6, %7, %cst {dimension_numbers = #tpu.dot_dimension_numbers<[1], [0], [0], [1], [0, 0, 1, 1], [], []>} : vector<8x32xbf16>, vector<32x32xbf16>, vector<8x32xf32> -> vector<8x32xf32>
    %cst_3 = arith.constant 5.65685415 : f32
    %9 = vector.broadcast %cst_3 : f32 to vector<8x32xf32>
    %10 = arith.mulf %8, %9 : vector<8x32xf32>
    %11 = arith.truncf %10 : vector<8x32xf32> to vector<8x32xbf16>
    %c0_4 = arith.constant 0 : index
    %c0_5 = arith.constant 0 : index
    %12 = vector.load %arg3[%c0_4, %c0_5] : memref<8x32xbf16, #tpu.memory_space<vmem>>, vector<8x32xbf16>
    tpu.vector_store %arg3[%c0_4, %c0_5], %11 {strides = array<i32>} : memref<8x32xbf16, #tpu.memory_space<vmem>>, vector<8x32xbf16>,
    return
  }
  func.func @transform_0(%arg0: i32) -> (i32, i32) {
    %c0_i32 = arith.constant 0 : i32
    %c0_i32_0 = arith.constant 0 : i32
    return %arg0, %c0_i32 : i32, i32
  }
  func.func @transform_1(%arg0: i32) -> (i32, i32) {
    %c0_i32 = arith.constant 0 : i32
    %c0_i32_0 = arith.constant 0 : i32
    %c0_i32_1 = arith.constant 0 : i32
    return %c0_i32, %c0_i32_0 : i32, i32
  }
  func.func @transform_2(%arg0: i32) -> (i32, i32) {
    %c0_i32 = arith.constant 0 : i32
    %c0_i32_0 = arith.constant 0 : i32
    return %arg0, %c0_i32 : i32, i32
  }
}

module attributes {stable_mosaic.version = 11 : i64} {
  func.func @_embed_onehot_kernel(%arg0: i32, %arg1: memref<8x1xi32, #tpu.memory_space<vmem>>, %arg2: memref<32x32xbf16, #tpu.memory_space<vmem>>, %arg3: memref<8x32xbf16, #tpu.memory_space<vmem>>) attributes {dimension_semantics = [#tpu.dimension_semantics<parallel>], iteration_bounds = array<i64: 2>, scalar_prefetch = 0 : i64, scratch_operands = 0 : i64, tpu.core_type = #tpu.core_type<tc>, window_params = [{transform_indices = @transform_0, window_bounds = array<i64: 8, 1>}, {pipeline_mode = #tpu.pipeline_mode<synchronous>, transform_indices = @transform_1, window_bounds = array<i64: 32, 32>}, {transform_indices = @transform_2, window_bounds = array<i64: 8, 32>}]} {
    %c0 = arith.constant 0 : index
    %c0_0 = arith.constant 0 : index
    %0 = vector.load %arg1[%c0, %c0_0] : memref<8x1xi32, #tpu.memory_space<vmem>>, vector<8x1xi32>
    %1 = tpu.iota {dimensions = array<i32: 1>} : vector<8x32xi32>
    %2 = vector.broadcast %0 : vector<8x1xi32> to vector<8x32xi32>
    %3 = arith.cmpi eq, %2, %1 : vector<8x32xi32>
    %4 = arith.extui %3 : vector<8x32xi1> to vector<8x32xi32>
    %5 = arith.sitofp %4 : vector<8x32xi32> to vector<8x32xf32>
    %6 = arith.truncf %5 : vector<8x32xf32> to vector<8x32xbf16>
    %c0_1 = arith.constant 0 : index
    %c0_2 = arith.constant 0 : index
    %7 = vector.load %arg2[%c0_1, %c0_2] : memref<32x32xbf16, #tpu.memory_space<vmem>>, vector<32x32xbf16>
    %cst = arith.constant dense<0.000000e+00> : vector<8x32xf32>
    %8 = tpu.matmul %6, %7, %cst {dimension_numbers = #tpu.dot_dimension_numbers<[1], [0], [0], [1], [0, 0, 1, 1], [], []>} : vector<8x32xbf16>, vector<32x32xbf16>, vector<8x32xf32> -> vector<8x32xf32>
    %cst_3 = arith.constant 5.65685415 : f32
    %9 = vector.broadcast %cst_3 : f32 to vector<8x32xf32>
    %10 = arith.mulf %8, %9 : vector<8x32xf32>
    %11 = arith.truncf %10 : vector<8x32xf32> to vector<8x32xbf16>
    %c0_4 = arith.constant 0 : index
    %c0_5 = arith.constant 0 : index
    %12 = vector.load %arg3[%c0_4, %c0_5] : memref<8x32xbf16, #tpu.memory_space<vmem>>, vector<8x32xbf16>
    tpu.vector_store %arg3[%c0_4, %c0_5], %11 {strides = array<i32>} : memref<8x32xbf16, #tpu.memory_space<vmem>>, vector<8x32xbf16>,
    return
  }
  func.func @transform_0(%arg0: i32) -> (i32, i32) {
    %c0_i32 = arith.constant 0 : i32
    %c0_i32_0 = arith.constant 0 : i32
    return %arg0, %c0_i32 : i32, i32
  }
  func.func @transform_1(%arg0: i32) -> (i32, i32) {
    %c0_i32 = arith.constant 0 : i32
    %c0_i32_0 = arith.constant 0 : i32
    %c0_i32_1 = arith.constant 0 : i32
    return %c0_i32, %c0_i32_0 : i32, i32
  }
  func.func @transform_2(%arg0: i32) -> (i32, i32) {
    %c0_i32 = arith.constant 0 : i32
    %c0_i32_0 = arith.constant 0 : i32
    return %arg0, %c0_i32 : i32, i32
  }
}

</mosaic_0001>

<llo_original>
// kernel: tpu_custom_call.1
$region0: #{tpu_custom_call.1}
  #allocation0 [shape = 'u32[]', space=smem, size = 0x4, offset = 0x4, fixed_abs, tag = 'smem constant byte address 0x4 - core index']
  #allocation1 [shape = 'u32[144,128]{1,0:T(1,128)}', space=vmem, size = 0x12000, scoped, tag = 'internal scratch']
  %s0 = inlined_call_operand.vmem [shape: s32[16,1], index: 0, kind: input, shape index: {}]
  %s1 = inlined_call_operand.vmem [shape: bf16[32,32], index: 1, kind: input, shape index: {}]
  %s2 = inlined_call_operand.hbm [shape: bf16[16,32], index: 2, kind: output, shape index: {}]
  %s3 = sld [smem:[#allocation0]]
  $region41: #{tpu_custom_call.1} parent=0
    _
  %s5 = ssub.s32 1, %s3
  %s6 = scalar_select 0, %s5, %s3
  $region1: #{tpu_custom_call.1} parent=0
    #allocation2 [shape = 'u8[4096]{0}', space=vmem, size = 0x1000, scoped, tag = 'output window, operand 0']
    #allocation3 [shape = 's32[2]{0}', space=sflag, size = 0x8, scoped, tag = 'scoped memory for tpu_custom_call.1']
    %7 = vsyncpa [#allocation3], 0
    %s8 = scalar_lea.sflag [#allocation3], 1
    %9 = vsyncpa %s8, 0
    loop: start=0, step=1, limit=4
    $region2: #{tpu_custom_call.1} parent=1 // loop_pre_header
      _
    $region3: #{tpu_custom_call.1} parent=1 // loop_header
      %s11 = sphi 0, %s15
      %p12 = scmp.ge.s32.totalorder %s11, 4
      %s21 = sphi 0, %s23
      %s24 = sphi 0, %s21
      %s25 = sphi 0, %s24
      %s41 = sphi 0, %s25
      %s45 = sphi 0, %s45
      %s47 = sphi 0, %s45
      %s48 = sphi 0, %s47
      %s62 = sphi 0, %s48
      %s68 = sphi 0, %s70
      %s71 = sphi 0, %s68
      %s72 = sphi 0, %s71
      %s88 = sphi 0, %s72
    $region4: #{tpu_custom_call.1} parent=1 // loop_header_branch
      %14 = sbr.rel (%p12) target = $region8
    $region5: #{tpu_custom_call.1} parent=1 // loop_body
      %s16 = ssub.s32 %s11, 1
      %s17 = ssub.s32 %s11, 2
      %s18 = sadd.s32 %s11, 1
      %s19 = ssub.s32 %s11, %s18
      %p20 = scmp.eq.s32.totalorder %s19, 0
      %s22 = sadd.s32 %s21, 1
      %s23 = scalar_select %p20, %s21, %s22
      %p26 = pneg %p20
      %p27 = scmp.eq.s32.totalorder %s11, 1
      %p28 = por %p26, %p27
      %p29 = scmp.ne.s32.totalorder %s21, %s24
      %p30 = scmp.eq.s32.totalorder %s11, 0
      %p31 = por %p29, %p30
      %p32 = scmp.ne.s32.totalorder %s21, %s24
      %p33 = scmp.eq.s32.totalorder %s16, 1
      %p34 = por %p32, %p33
      %p35 = scmp.ne.s32.totalorder %s24, %s25
      %p36 = scmp.eq.s32.totalorder %s16, 0
      %p37 = por %p35, %p36
      %p38 = scmp.ne.s32.totalorder %s24, %s25
      %p39 = scmp.eq.s32.totalorder %s17, 1
      %p40 = por %p38, %p39
      %p42 = scmp.ne.s32.totalorder %s25, %s41
      %p43 = scmp.eq.s32.totalorder %s17, 0
      %p44 = por %p42, %p43
      %s46 = sadd.s32 %s45, 1
      %p49 = scmp.eq.s32.totalorder %s11, 1
      %p50 = scmp.ne.s32.totalorder %s45, %s47
      %p51 = scmp.eq.s32.totalorder %s11, 0
      %p52 = por %p50, %p51
      %p53 = scmp.ne.s32.totalorder %s45, %s47
      %p54 = scmp.eq.s32.totalorder %s16, 1
      %p55 = por %p53, %p54
      %p56 = scmp.ne.s32.totalorder %s47, %s48
      %p57 = scmp.eq.s32.totalorder %s16, 0
      %p58 = por %p56, %p57
      %p59 = scmp.ne.s32.totalorder %s47, %s48
      %p60 = scmp.eq.s32.totalorder %s17, 1
      %p61 = por %p59, %p60
      %p63 = scmp.ne.s32.totalorder %s48, %s62
      %p64 = scmp.eq.s32.totalorder %s17, 0
      %p65 = por %p63, %p64
      %s66 = ssub.s32 %s11, %s18
      %p67 = scmp.eq.s32.totalorder %s66, 0
      %s69 = sadd.s32 %s68, 1
      %s70 = scalar_select %p67, %s68, %s69
      %p73 = pneg %p67
      %p74 = scmp.eq.s32.totalorder %s11, 1
      %p75 = por %p73, %p74
      %p76 = scmp.ne.s32.totalorder %s68, %s71
      %p77 = scmp.eq.s32.totalorder %s11, 0
      %p78 = por %p76, %p77
      %p79 = scmp.ne.s32.totalorder %s68, %s71
      %p80 = scmp.eq.s32.totalorder %s16, 1
      %p81 = por %p79, %p80
      %p82 = scmp.ne.s32.totalorder %s71, %s72
      %p83 = scmp.eq.s32.totalorder %s16, 0
      %p84 = por %p82, %p83
      %p85 = scmp.ne.s32.totalorder %s71, %s72
      %p86 = scmp.eq.s32.totalorder %s17, 1
      %p87 = por %p85, %p86
      %p89 = scmp.ne.s32.totalorder %s72, %s88
      %p90 = scmp.eq.s32.totalorder %s17, 0
      %p91 = por %p89, %p90
      %p92 = scmp.le.s32.totalorder 1, %s11
      %p93 = scmp.lt.s32.totalorder %s11, 3
      %p94 = pnand %p92, %p93
      %p95 = pneg %p94
      // Predicated region
      $region9: #{tpu_custom_call.1} parent=5 // pred_check
        _
      $region10: #{tpu_custom_call.1} parent=5 // pred_check_branch
        %97 = sbr.rel (%p94) target = $region12
      $region11: #{tpu_custom_call.1} parent=5 // pred_region
        %s98 = ssub.s32 %s11, 1
        // Predicated region
        $region13: #{tpu_custom_call.1} parent=11 // pred_check
          %p99 = pneg %p58
        $region14: #{tpu_custom_call.1} parent=11 // pred_check_branch
          %101 = sbr.rel (%p99) target = $region16
        $region15: #{tpu_custom_call.1} parent=11 // pred_region
          _
        $region16: #{tpu_custom_call.1} parent=11 // pred_fallthru
          _
      $region12: #{tpu_custom_call.1} parent=5 // pred_fallthru
        _
      %p102 = scmp.lt.s32.totalorder %s11, 2
      // Predicated region
      $region17: #{tpu_custom_call.1} parent=5 // pred_check
        %p103 = pneg %p102
      $region18: #{tpu_custom_call.1} parent=5 // pred_check_branch
        %105 = sbr.rel (%p103) target = $region20
      $region19: #{tpu_custom_call.1} parent=5 // pred_region
        // Predicated region
        $region21: #{tpu_custom_call.1} parent=19 // pred_check
          %p106 = pneg %p31
        $region22: #{tpu_custom_call.1} parent=19 // pred_check_branch
          %108 = sbr.rel (%p106) target = $region24
        $region23: #{tpu_custom_call.1} parent=19 // pred_region
          %p109 = scmp.lt.s32.totalorder %s11, 1
          %s110 = scalar_select %p109, %s11, 1
          %s111 = smul.addr %s110, 8
          %s112 = scalar_lea.vmem %s0, %s111
        $region24: #{tpu_custom_call.1} parent=19 // pred_fallthru
          _
      $region20: #{tpu_custom_call.1} parent=5 // pred_fallthru
        _
      %p113 = scmp.le.s32.totalorder 1, %s11
      %p114 = scmp.lt.s32.totalorder %s11, 3
      %p115 = pnand %p113, %p114
      %p116 = pneg %p115
      // Predicated region
      $region25: #{tpu_custom_call.1} parent=5 // pred_check
        _
      $region26: #{tpu_custom_call.1} parent=5 // pred_check_branch
        %118 = sbr.rel (%p115) target = $region28
      $region27: #{tpu_custom_call.1} parent=5 // pred_region
        %s119 = ssub.s32 %s11, 1
        %p120 = scmp.lt.s32.totalorder %s16, 1
        %s121 = scalar_select %p120, %s16, 1
        %s122 = smul.addr %s121, 8
        %s123 = scalar_lea.vmem %s0, %s122
        %p124 = pneg %p37
        %p125 = pneg %p34
        %p126 = pneg %p58
        %p127 = pneg %p55
        %p128 = pneg %p84
        %p129 = pneg %p81
        %s130 = sand.u32 %s71, 1
        %s131 = scalar_lea.sflag [#allocation3], %s130
        %s132 = sand.u32 %s71, 1
        %s133 = smul.addr %s132, 4
        %s134 = scalar_lea.vmem [#allocation2], %s133
        %p135 = scmp.lt.s32.totalorder %s16, 1
        %s136 = scalar_select %p135, %s16, 1
        %s137 = smul.addr %s136, 8
        %s138 = scalar_lea.vmem %s0, %s137
        %v140 = vld [vmem:[%s138] sm:$0xff]
        %v141 = vlaneseq
        %v142 = vand.u32 %v141, 127
        %143 = vset.pattern.permute.xlu0 0
        %144 = vperm.xlu0 %143, %v140
        %v145 = vpop.permute.xlu0 %144
        %vm146 = vcmp.eq.s32.totalorder %v145, %v142
        %v147 = vsel %vm146, 1, 0
        %v148 = vcvt.s32.f32 %v147
        %v149 = vpack.c.bf16 %v148, %v148
        %v150 = vld [vmem:[%s1] sm:$0xf]
        %v151 = vld [vmem:[%s1 + $0x4] sm:$0xf]
        %v152 = vld [vmem:[%s1 + $0x8] sm:$0xf]
        %v153 = vld [vmem:[%s1 + $0xc] sm:$0xf]
        %v158 = vunpack.c.l.b16 %v150
        %v159 = vunpack.c.l.b16 %v151
        %v160 = vunpack.c.l.b16 %v152
        %v161 = vunpack.c.l.b16 %v153
        %v162 = vpack.c.b16 %v159, %v158
        %v163 = vpack.c.b16 %v161, %v160
        %vm166 = vcmask 261120
        %v168 = vsel %vm166, %v149, 0
        %170 = vmatprep.subr.bf16.mxu0 0
        %171 = vmatpush1.bf16.msra.mxu0 0
        %172 = vmatprep.subr.bf16.mxu0 0
        %173 = vmatpush1.bf16.msra.mxu0 0
        %174 = vmatprep.subr.bf16.mxu0 0
        %175 = vmatpush1.bf16.msra.mxu0 0
        %176 = vmatprep.subr.bf16.mxu0 0
        %177 = vmatpush1.bf16.msra.mxu0 0
        %178 = vmatprep.subr.bf16.mxu0 0
        %179 = vmatpush1.bf16.msra.mxu0 0
        %180 = vmatprep.subr.bf16.mxu0 0
        %181 = vmatpush1.bf16.msra.mxu0 0
        %182 = vmatprep.subr.bf16.mxu0 0
        %183 = vmatpush1.bf16.msra.mxu0 %v163
        %184 = vmatprep.subr.bf16.mxu0 0
        %185 = vmatpush1.bf16.msra.mxu0 %v162
        %186 = vmatprep.subr.bf16.mxu0 0
        %187 = vmatpush2.bf16.msra.mxu0 0
        %188 = vmatprep.subr.bf16.mxu0 0
        %189 = vmatpush2.bf16.msra.mxu0 0
        %190 = vmatprep.subr.bf16.mxu0 0
        %191 = vmatpush2.bf16.msra.mxu0 0
        %192 = vmatprep.subr.bf16.mxu0 0
        %193 = vmatpush2.bf16.msra.mxu0 0
        %194 = vmatprep.subr.bf16.mxu0 0
        %195 = vmatpush2.bf16.msra.mxu0 0
        %196 = vmatprep.subr.bf16.mxu0 0
        %197 = vmatpush2.bf16.msra.mxu0 0
        %198 = vmatprep.subr.bf16.mxu0 0
        %199 = vmatpush2.bf16.msra.mxu0 0
        %200 = vmatprep.subr.bf16.mxu0 0
        %201 = vmatpush2.bf16.msra.mxu0 0
        %202 = vmatprep.mubr.bf16.mxu0 0
        %203 = vmatmul.mubr.bf16.gmra.mxu0 %v168
        %v204 = vpop.f32.mrf.mxu0
        %v205 = vadd.f32 0.0, %v204
        %v206 = vpop.f32.mrf.mxu0
        %v207 = vpop.f32.mrf.mxu0
        %v208 = vpop.f32.mrf.mxu0
        %209 = vdwg.mxu0
        %v210 = vmul.f32 %v205, 5.656854
        %v211 = vpack.c.bf16 %v210, %v210
        %vm212 = vcmask 257024
        %213 = vst.msk [vmem:[%s134] sm:$0xf] %vm212, %v211
        %s214 = sand.u32 %s71, 1
        %s215 = scalar_lea.sflag [#allocation3], %s214
        %s216 = sand.u32 %s71, 1
        %s217 = smul.addr %s216, 4
        %s218 = scalar_lea.vmem [#allocation2], %s217
        // Predicated region
        $region29: #{tpu_custom_call.1} parent=27 // pred_check
          %p219 = pneg %p81
        $region30: #{tpu_custom_call.1} parent=27 // pred_check_branch
          %221 = sbr.rel (%p219) target = $region32
        $region31: #{tpu_custom_call.1} parent=27 // pred_region
          %s223 = ssub.s32 64, 64
          %224 = vsyncadd %s215, %s223
          %s225 = smul.addr %s16, 64
          %s226 = scalar_lea.hbm %s2, %s225
          %s228 = sshll.u32 %s218, 4
          %s229 = int_to_ptr.vmem [resolvable:$true] %s228
          %231 = dma.vmem_to_hbm [thread:$0]  %s229, 64, %s226, %s215
        $region32: #{tpu_custom_call.1} parent=27 // pred_fallthru
          _
      $region28: #{tpu_custom_call.1} parent=5 // pred_fallthru
        _
      %p232 = scmp.le.s32.totalorder 2, %s11
      // Predicated region
      $region33: #{tpu_custom_call.1} parent=5 // pred_check
        %p233 = pneg %p232
      $region34: #{tpu_custom_call.1} parent=5 // pred_check_branch
        %235 = sbr.rel (%p233) target = $region36
      $region35: #{tpu_custom_call.1} parent=5 // pred_region
        %s236 = ssub.s32 %s11, 2
        // Predicated region
        $region37: #{tpu_custom_call.1} parent=35 // pred_check
          %p237 = pneg %p87
        $region38: #{tpu_custom_call.1} parent=35 // pred_check_branch
          %239 = sbr.rel (%p237) target = $region40
        $region39: #{tpu_custom_call.1} parent=35 // pred_region
          %s240 = sand.u32 %s72, 1
          %s241 = scalar_lea.sflag [#allocation3], %s240
          %s242 = sand.u32 %s72, 1
          %s243 = smul.addr %s242, 4
          %s244 = scalar_lea.vmem [#allocation2], %s243
          %245 = dma.done %s241, 64
        $region40: #{tpu_custom_call.1} parent=35 // pred_fallthru
          _
      $region36: #{tpu_custom_call.1} parent=5 // pred_fallthru
        _
    $region6: #{tpu_custom_call.1} parent=1 // loop_footer
      %s15 = sadd.s32 1, %s11
    $region7: #{tpu_custom_call.1} parent=1 // loop_footer_branch
      %10 = sbr.rel target = $region3
    $region8: #{tpu_custom_call.1} parent=1 // loop_exit
      _
    %246 = vsyncpa [#allocation3], 1
    %s247 = scalar_lea.sflag [#allocation3], 1
    %248 = vsyncpa %s247, 1

// kernel: tpu_custom_call.1
$region0: #{tpu_custom_call.1}
  #allocation0 [shape = 'u32[]', space=smem, size = 0x4, offset = 0x4, fixed_abs, tag = 'smem constant byte address 0x4 - core index']
  #allocation1 [shape = 'u32[144,128]{1,0:T(1,128)}', space=vmem, size = 0x12000, scoped, tag = 'internal scratch']
  %s0 = inlined_call_operand.vmem [shape: s32[16,1], index: 0, kind: input, shape index: {}]
  %s1 = inlined_call_operand.vmem [shape: bf16[32,32], index: 1, kind: input, shape index: {}]
  %s2 = inlined_call_operand.hbm [shape: bf16[16,32], index: 2, kind: output, shape index: {}]
  %s3 = sld [smem:[#allocation0]]
  $region41: #{tpu_custom_call.1} parent=0
    _
  %s5 = ssub.s32 1, %s3
  %s6 = scalar_select 0, %s5, %s3
  $region1: #{tpu_custom_call.1} parent=0
    #allocation2 [shape = 'u8[4096]{0}', space=vmem, size = 0x1000, scoped, tag = 'output window, operand 0']
    #allocation3 [shape = 's32[2]{0}', space=sflag, size = 0x8, scoped, tag = 'scoped memory for tpu_custom_call.1']
    %7 = vsyncpa [#allocation3], 0
    %s8 = scalar_lea.sflag [#allocation3], 1
    %9 = vsyncpa %s8, 0
    loop: start=0, step=1, limit=4
    $region2: #{tpu_custom_call.1} parent=1 // loop_pre_header
      _
    $region3: #{tpu_custom_call.1} parent=1 // loop_header
      %s11 = sphi 0, %s15
      %p12 = scmp.ge.s32.totalorder %s11, 4
      %s21 = sphi 0, %s23
      %s24 = sphi 0, %s21
      %s25 = sphi 0, %s24
      %s41 = sphi 0, %s25
      %s45 = sphi 0, %s45
      %s47 = sphi 0, %s45
      %s48 = sphi 0, %s47
      %s62 = sphi 0, %s48
      %s68 = sphi 0, %s70
      %s71 = sphi 0, %s68
      %s72 = sphi 0, %s71
      %s88 = sphi 0, %s72
    $region4: #{tpu_custom_call.1} parent=1 // loop_header_branch
      %14 = sbr.rel (%p12) target = $region8
    $region5: #{tpu_custom_call.1} parent=1 // loop_body
      %s16 = ssub.s32 %s11, 1
      %s17 = ssub.s32 %s11, 2
      %s18 = sadd.s32 %s11, 1
      %s19 = ssub.s32 %s11, %s18
      %p20 = scmp.eq.s32.totalorder %s19, 0
      %s22 = sadd.s32 %s21, 1
      %s23 = scalar_select %p20, %s21, %s22
      %p26 = pneg %p20
      %p27 = scmp.eq.s32.totalorder %s11, 1
      %p28 = por %p26, %p27
      %p29 = scmp.ne.s32.totalorder %s21, %s24
      %p30 = scmp.eq.s32.totalorder %s11, 0
      %p31 = por %p29, %p30
      %p32 = scmp.ne.s32.totalorder %s21, %s24
      %p33 = scmp.eq.s32.totalorder %s16, 1
      %p34 = por %p32, %p33
      %p35 = scmp.ne.s32.totalorder %s24, %s25
      %p36 = scmp.eq.s32.totalorder %s16, 0
      %p37 = por %p35, %p36
      %p38 = scmp.ne.s32.totalorder %s24, %s25
      %p39 = scmp.eq.s32.totalorder %s17, 1
      %p40 = por %p38, %p39
      %p42 = scmp.ne.s32.totalorder %s25, %s41
      %p43 = scmp.eq.s32.totalorder %s17, 0
      %p44 = por %p42, %p43
      %s46 = sadd.s32 %s45, 1
      %p49 = scmp.eq.s32.totalorder %s11, 1
      %p50 = scmp.ne.s32.totalorder %s45, %s47
      %p51 = scmp.eq.s32.totalorder %s11, 0
      %p52 = por %p50, %p51
      %p53 = scmp.ne.s32.totalorder %s45, %s47
      %p54 = scmp.eq.s32.totalorder %s16, 1
      %p55 = por %p53, %p54
      %p56 = scmp.ne.s32.totalorder %s47, %s48
      %p57 = scmp.eq.s32.totalorder %s16, 0
      %p58 = por %p56, %p57
      %p59 = scmp.ne.s32.totalorder %s47, %s48
      %p60 = scmp.eq.s32.totalorder %s17, 1
      %p61 = por %p59, %p60
      %p63 = scmp.ne.s32.totalorder %s48, %s62
      %p64 = scmp.eq.s32.totalorder %s17, 0
      %p65 = por %p63, %p64
      %s66 = ssub.s32 %s11, %s18
      %p67 = scmp.eq.s32.totalorder %s66, 0
      %s69 = sadd.s32 %s68, 1
      %s70 = scalar_select %p67, %s68, %s69
      %p73 = pneg %p67
      %p74 = scmp.eq.s32.totalorder %s11, 1
      %p75 = por %p73, %p74
      %p76 = scmp.ne.s32.totalorder %s68, %s71
      %p77 = scmp.eq.s32.totalorder %s11, 0
      %p78 = por %p76, %p77
      %p79 = scmp.ne.s32.totalorder %s68, %s71
      %p80 = scmp.eq.s32.totalorder %s16, 1
      %p81 = por %p79, %p80
      %p82 = scmp.ne.s32.totalorder %s71, %s72
      %p83 = scmp.eq.s32.totalorder %s16, 0
      %p84 = por %p82, %p83
      %p85 = scmp.ne.s32.totalorder %s71, %s72
      %p86 = scmp.eq.s32.totalorder %s17, 1
      %p87 = por %p85, %p86
      %p89 = scmp.ne.s32.totalorder %s72, %s88
      %p90 = scmp.eq.s32.totalorder %s17, 0
      %p91 = por %p89, %p90
      %p92 = scmp.le.s32.totalorder 1, %s11
      %p93 = scmp.lt.s32.totalorder %s11, 3
      %p94 = pnand %p92, %p93
      %p95 = pneg %p94
      // Predicated region
      $region9: #{tpu_custom_call.1} parent=5 // pred_check
        _
      $region10: #{tpu_custom_call.1} parent=5 // pred_check_branch
        %97 = sbr.rel (%p94) target = $region12
      $region11: #{tpu_custom_call.1} parent=5 // pred_region
        %s98 = ssub.s32 %s11, 1
        // Predicated region
        $region13: #{tpu_custom_call.1} parent=11 // pred_check
          %p99 = pneg %p58
        $region14: #{tpu_custom_call.1} parent=11 // pred_check_branch
          %101 = sbr.rel (%p99) target = $region16
        $region15: #{tpu_custom_call.1} parent=11 // pred_region
          _
        $region16: #{tpu_custom_call.1} parent=11 // pred_fallthru
          _
      $region12: #{tpu_custom_call.1} parent=5 // pred_fallthru
        _
      %p102 = scmp.lt.s32.totalorder %s11, 2
      // Predicated region
      $region17: #{tpu_custom_call.1} parent=5 // pred_check
        %p103 = pneg %p102
      $region18: #{tpu_custom_call.1} parent=5 // pred_check_branch
        %105 = sbr.rel (%p103) target = $region20
      $region19: #{tpu_custom_call.1} parent=5 // pred_region
        // Predicated region
        $region21: #{tpu_custom_call.1} parent=19 // pred_check
          %p106 = pneg %p31
        $region22: #{tpu_custom_call.1} parent=19 // pred_check_branch
          %108 = sbr.rel (%p106) target = $region24
        $region23: #{tpu_custom_call.1} parent=19 // pred_region
          %p109 = scmp.lt.s32.totalorder %s11, 1
          %s110 = scalar_select %p109, %s11, 1
          %s111 = smul.addr %s110, 8
          %s112 = scalar_lea.vmem %s0, %s111
        $region24: #{tpu_custom_call.1} parent=19 // pred_fallthru
          _
      $region20: #{tpu_custom_call.1} parent=5 // pred_fallthru
        _
      %p113 = scmp.le.s32.totalorder 1, %s11
      %p114 = scmp.lt.s32.totalorder %s11, 3
      %p115 = pnand %p113, %p114
      %p116 = pneg %p115
      // Predicated region
      $region25: #{tpu_custom_call.1} parent=5 // pred_check
        _
      $region26: #{tpu_custom_call.1} parent=5 // pred_check_branch
        %118 = sbr.rel (%p115) target = $region28
      $region27: #{tpu_custom_call.1} parent=5 // pred_region
        %s119 = ssub.s32 %s11, 1
        %p120 = scmp.lt.s32.totalorder %s16, 1
        %s121 = scalar_select %p120, %s16, 1
        %s122 = smul.addr %s121, 8
        %s123 = scalar_lea.vmem %s0, %s122
        %p124 = pneg %p37
        %p125 = pneg %p34
        %p126 = pneg %p58
        %p127 = pneg %p55
        %p128 = pneg %p84
        %p129 = pneg %p81
        %s130 = sand.u32 %s71, 1
        %s131 = scalar_lea.sflag [#allocation3], %s130
        %s132 = sand.u32 %s71, 1
        %s133 = smul.addr %s132, 4
        %s134 = scalar_lea.vmem [#allocation2], %s133
        %p135 = scmp.lt.s32.totalorder %s16, 1
        %s136 = scalar_select %p135, %s16, 1
        %s137 = smul.addr %s136, 8
        %s138 = scalar_lea.vmem %s0, %s137
        %v140 = vld [vmem:[%s138] sm:$0xff]
        %v141 = vlaneseq
        %v142 = vand.u32 %v141, 127
        %143 = vset.pattern.permute.xlu0 0
        %144 = vperm.xlu0 %143, %v140
        %v145 = vpop.permute.xlu0 %144
        %vm146 = vcmp.eq.s32.totalorder %v145, %v142
        %v147 = vsel %vm146, 1, 0
        %v148 = vcvt.s32.f32 %v147
        %v149 = vpack.c.bf16 %v148, %v148
        %v150 = vld [vmem:[%s1] sm:$0xf]
        %v151 = vld [vmem:[%s1 + $0x4] sm:$0xf]
        %v152 = vld [vmem:[%s1 + $0x8] sm:$0xf]
        %v153 = vld [vmem:[%s1 + $0xc] sm:$0xf]
        %v158 = vunpack.c.l.b16 %v150
        %v159 = vunpack.c.l.b16 %v151
        %v160 = vunpack.c.l.b16 %v152
        %v161 = vunpack.c.l.b16 %v153
        %v162 = vpack.c.b16 %v159, %v158
        %v163 = vpack.c.b16 %v161, %v160
        %vm166 = vcmask 261120
        %v168 = vsel %vm166, %v149, 0
        %170 = vmatprep.subr.bf16.mxu0 0
        %171 = vmatpush1.bf16.msra.mxu0 0
        %172 = vmatprep.subr.bf16.mxu0 0
        %173 = vmatpush1.bf16.msra.mxu0 0
        %174 = vmatprep.subr.bf16.mxu0 0
        %175 = vmatpush1.bf16.msra.mxu0 0
        %176 = vmatprep.subr.bf16.mxu0 0
        %177 = vmatpush1.bf16.msra.mxu0 0
        %178 = vmatprep.subr.bf16.mxu0 0
        %179 = vmatpush1.bf16.msra.mxu0 0
        %180 = vmatprep.subr.bf16.mxu0 0
        %181 = vmatpush1.bf16.msra.mxu0 0
        %182 = vmatprep.subr.bf16.mxu0 0
        %183 = vmatpush1.bf16.msra.mxu0 %v163
        %184 = vmatprep.subr.bf16.mxu0 0
        %185 = vmatpush1.bf16.msra.mxu0 %v162
        %186 = vmatprep.subr.bf16.mxu0 0
        %187 = vmatpush2.bf16.msra.mxu0 0
        %188 = vmatprep.subr.bf16.mxu0 0
        %189 = vmatpush2.bf16.msra.mxu0 0
        %190 = vmatprep.subr.bf16.mxu0 0
        %191 = vmatpush2.bf16.msra.mxu0 0
        %192 = vmatprep.subr.bf16.mxu0 0
        %193 = vmatpush2.bf16.msra.mxu0 0
        %194 = vmatprep.subr.bf16.mxu0 0
        %195 = vmatpush2.bf16.msra.mxu0 0
        %196 = vmatprep.subr.bf16.mxu0 0
        %197 = vmatpush2.bf16.msra.mxu0 0
        %198 = vmatprep.subr.bf16.mxu0 0
        %199 = vmatpush2.bf16.msra.mxu0 0
        %200 = vmatprep.subr.bf16.mxu0 0
        %201 = vmatpush2.bf16.msra.mxu0 0
        %202 = vmatprep.mubr.bf16.mxu0 0
        %203 = vmatmul.mubr.bf16.gmra.mxu0 %v168
        %v204 = vpop.f32.mrf.mxu0
        %v205 = vadd.f32 0.0, %v204
        %v206 = vpop.f32.mrf.mxu0
        %v207 = vpop.f32.mrf.mxu0
        %v208 = vpop.f32.mrf.mxu0
        %209 = vdwg.mxu0
        %v210 = vmul.f32 %v205, 5.656854
        %v211 = vpack.c.bf16 %v210, %v210
        %vm212 = vcmask 257024
        %213 = vst.msk [vmem:[%s134] sm:$0xf] %vm212, %v211
        %s214 = sand.u32 %s71, 1
        %s215 = scalar_lea.sflag [#allocation3], %s214
        %s216 = sand.u32 %s71, 1
        %s217 = smul.addr %s216, 4
        %s218 = scalar_lea.vmem [#allocation2], %s217
        // Predicated region
        $region29: #{tpu_custom_call.1} parent=27 // pred_check
          %p219 = pneg %p81
        $region30: #{tpu_custom_call.1} parent=27 // pred_check_branch
          %221 = sbr.rel (%p219) target = $region32
        $region31: #{tpu_custom_call.1} parent=27 // pred_region
          %s223 = ssub.s32 64, 64
          %224 = vsyncadd %s215, %s223
          %s225 = smul.addr %s16, 64
          %s226 = scalar_lea.hbm %s2, %s225
          %s228 = sshll.u32 %s218, 4
          %s229 = int_to_ptr.vmem [resolvable:$true] %s228
          %231 = dma.vmem_to_hbm [thread:$0]  %s229, 64, %s226, %s215
        $region32: #{tpu_custom_call.1} parent=27 // pred_fallthru
          _
      $region28: #{tpu_custom_call.1} parent=5 // pred_fallthru
        _
      %p232 = scmp.le.s32.totalorder 2, %s11
      // Predicated region
      $region33: #{tpu_custom_call.1} parent=5 // pred_check
        %p233 = pneg %p232
      $region34: #{tpu_custom_call.1} parent=5 // pred_check_branch
        %235 = sbr.rel (%p233) target = $region36
      $region35: #{tpu_custom_call.1} parent=5 // pred_region
        %s236 = ssub.s32 %s11, 2
        // Predicated region
        $region37: #{tpu_custom_call.1} parent=35 // pred_check
          %p237 = pneg %p87
        $region38: #{tpu_custom_call.1} parent=35 // pred_check_branch
          %239 = sbr.rel (%p237) target = $region40
        $region39: #{tpu_custom_call.1} parent=35 // pred_region
          %s240 = sand.u32 %s72, 1
          %s241 = scalar_lea.sflag [#allocation3], %s240
          %s242 = sand.u32 %s72, 1
          %s243 = smul.addr %s242, 4
          %s244 = scalar_lea.vmem [#allocation2], %s243
          %245 = dma.done %s241, 64
        $region40: #{tpu_custom_call.1} parent=35 // pred_fallthru
          _
      $region36: #{tpu_custom_call.1} parent=5 // pred_fallthru
        _
    $region6: #{tpu_custom_call.1} parent=1 // loop_footer
      %s15 = sadd.s32 1, %s11
    $region7: #{tpu_custom_call.1} parent=1 // loop_footer_branch
      %10 = sbr.rel target = $region3
    $region8: #{tpu_custom_call.1} parent=1 // loop_exit
      _
    %246 = vsyncpa [#allocation3], 1
    %s247 = scalar_lea.sflag [#allocation3], 1
    %248 = vsyncpa %s247, 1

</llo_original>
